<compile_context>
chip_gen: v7x
topology: tpu7x:2x2x1
jax: 0.10.0
libtpu: 0.0.40
codegen_flags: <defaults>
</compile_context>

<pallas_src>
import functools

import jax
import jax.numpy as jnp
import numpy as np
from jax import lax
from jax.experimental import pallas as pl
from jax.experimental.pallas import tpu as pltpu

_INV_SQRT2 = 0.7071067811865475


def _gelu_exact(x):
    # Exact (erf-based) GELU, matching torch.nn.GELU() default.
    return 0.5 * x * (1.0 + lax.erf(x * _INV_SQRT2))


def _round_up(x, m):
    return ((x + m - 1) // m) * m


def _vmem_capacity_bytes():
    try:
        return int(pltpu.get_tpu_info().vmem_capacity_bytes)
    except Exception:
        return 64 * 1024 * 1024  # conservative (v7x per-TensorCore) default


def _pick_tl(l_out, tl):
    """Output-length tile. Large tiles amortize per-step overhead; whole row when modest."""
    if tl is not None:
        if tl >= l_out:
            return l_out
        t = max(128, (tl // 128) * 128)          # partial tiles must be 128-lane multiples
        return l_out if t >= l_out else t
    return l_out if l_out <= 4096 else 2048


def res_cnn_forward(x_ncl, gamma, beta, run_mean, run_var, conv_w, conv_b,
                    *, stride, eps=1e-5, tl=None):
    """Forward pass of ResCNN (eval mode). x_ncl: (N, C_in, L). Returns (N, C_out, L_out)."""
    N, C_in, L = x_ncl.shape
    C_out, _, K = conv_w.shape
    pad = K // 2
    L_out = (L + 2 * pad - K) // stride + 1

    TL = _pick_tl(L_out, tl)                      # output-length tile
    n_lt = -(-L_out // TL)                        # number of length tiles
    TLS = TL * stride                             # input advance per output tile
    if stride == 1:
        W_win = TL + K - 1                        # per-tile activation window (lane slices)
    else:
        W_win = _round_up(TL * stride + K - 1, 8)  # sublane-rounded for length-major scratch
    # Padded-activation buffer length: left pad + data + right zeros, rounded for lane layout.
    Lp = _round_up(max(pad + L, (n_lt - 1) * TLS + W_win), 128)

    in_bytes = jnp.dtype(x_ncl.dtype).itemsize
    out_dtype = x_ncl.dtype
    out_bytes = jnp.dtype(out_dtype).itemsize

    # ---- VMEM budget (computed, per-generation cap) -------------------------------
    cap = _vmem_capacity_bytes()
    need = (2 * C_in * L * in_bytes               # input row, double-buffered by the pipeline
            + C_in * Lp * 4                       # padded-activation scratch
            + 2 * C_out * TL * out_bytes          # output tile, double-buffered
            + (W_win * C_in * 4 if stride > 1 else 0)
            + (2 * C_in + K * C_in * C_out + C_out) * 4)
    if need > int(0.8 * cap):
        # TODO(synk): halo-DMA length-blocked input path for rows exceeding VMEM residency.
        raise NotImplementedError("input row too large for whole-row VMEM residency")
    vmem_limit = int(min(cap, need + (16 << 20)))

    # ---- parameter setup (glue) ----------------------------------------------------
    scale = (gamma / jnp.sqrt(run_var + eps)).astype(jnp.float32)
    shift = (beta - run_mean * scale).astype(jnp.float32)
    scale2 = scale.reshape(C_in, 1)               # broadcast over lanes (length axis)
    shift2 = shift.reshape(C_in, 1)
    if stride == 1:
        # channels-major im2col weight: w2[co, k*C_in + ci] = conv_w[co, ci, k]
        w2 = jnp.transpose(conv_w, (0, 2, 1)).reshape(C_out, K * C_in).astype(jnp.float32)
        b2 = conv_b.reshape(C_out, 1).astype(jnp.float32)
    else:
        # length-major im2col weight: w2[k*C_in + ci, co] = conv_w[co, ci, k]
        w2 = jnp.transpose(conv_w, (2, 1, 0)).reshape(K * C_in, C_out).astype(jnp.float32)
        b2 = conv_b.reshape(1, C_out).astype(jnp.float32)

    start_hint = 128 if TLS % 128 == 0 else (8 if TLS % 8 == 0 else 1)
    single_tile = (n_lt == 1)

    # ---- Pallas kernel --------------------------------------------------------------
    def kernel(x_ref, scale_ref, shift_ref, w_ref, b_ref, o_ref, act_buf, *maybe_scr):
        j = pl.program_id(1)

        # BN (folded) + exact GELU once per batch row into a zero-padded channels-major buffer.
        # The zeroed buffer provides the conv's zero padding AFTER the activation, so no
        # per-tile boundary masking is needed. Dropout = identity (eval).
        @pl.when(j == 0)
        def _():
            act_buf[...] = jnp.zeros_like(act_buf)
            x = x_ref[...].astype(jnp.float32)                        # (C_in, L)
            act_buf[:, pad:pad + L] = _gelu_exact(x * scale_ref[...] + shift_ref[...])

        start = 0 if single_tile else pl.multiple_of(j * TLS, start_hint)
        win = act_buf[:, pl.ds(start, W_win)]                         # (C_in, W_win)

        if stride == 1:
            # Channels-on-sublanes / length-on-lanes throughout: K static lane-offset slices,
            # sublane concat, single MXU matmul, result already (C_out, TL) -> lane-dense store.
            cols = [win[:, k:k + TL] for k in range(K)]               # each (C_in, TL)
            patch = jnp.concatenate(cols, axis=0) if K > 1 else cols[0]   # (K*C_in, TL)
            res = jnp.dot(w_ref[...], patch,
                          preferred_element_type=jnp.float32)         # (C_out, TL)
            o_ref[...] = (res + b_ref[...]).astype(o_ref.dtype)
        else:
            # stride > 1: previously validated length-major path (sublane-strided slices).
            act_t = maybe_scr[0]
            act_t[...] = win.T                                        # (W_win, C_in)
            cols = [act_t[pl.ds(k, TL, stride), :] for k in range(K)]  # each (TL, C_in)
            patch = jnp.concatenate(cols, axis=1) if K > 1 else cols[0]   # (TL, K*C_in)
            res = jnp.dot(patch, w_ref[...],
                          preferred_element_type=jnp.float32)         # (TL, C_out)
            o_ref[...] = (res + b_ref[...]).T.astype(o_ref.dtype)     # (C_out, TL)

    scratch = [pltpu.VMEM((C_in, Lp), jnp.float32)]                   # padded activation row
    if stride > 1:
        scratch.append(pltpu.VMEM((W_win, C_in), jnp.float32))        # length-major window

    out = pl.pallas_call(
        kernel,
        out_shape=jax.ShapeDtypeStruct((N, C_out, L_out), out_dtype),
        grid=(N, n_lt),
        in_specs=[
            # Whole input row auto-pipelined into VMEM: one large contiguous DMA per batch row,
            # kept resident across all length tiles (index map ignores j).
            pl.BlockSpec((None, C_in, L), lambda n, j: (n, 0, 0)),
            pl.BlockSpec(memory_space=pltpu.MemorySpace.VMEM),        # scale  (C_in, 1)
            pl.BlockSpec(memory_space=pltpu.MemorySpace.VMEM),        # shift  (C_in, 1)
            pl.BlockSpec(memory_space=pltpu.MemorySpace.VMEM),        # im2col weight
            pl.BlockSpec(memory_space=pltpu.MemorySpace.VMEM),        # bias
        ],
        out_specs=pl.BlockSpec((None, C_out, TL), lambda n, j: (n, 0, j)),
        scratch_shapes=scratch,
        compiler_params=pltpu.CompilerParams(
            dimension_semantics=("parallel", "arbitrary"),
            vmem_limit_bytes=vmem_limit,
        ),
    )(x_ncl, scale2, shift2, w2, b2)
    return out


def res_cnn_reference(x, gamma, beta, run_mean, run_var, conv_w, conv_b,
                      *, stride, eps=1e-5):
    """Pure-JAX reference (eval-mode semantics), NCL layout like PyTorch."""
    K = conv_w.shape[-1]
    pad = K // 2
    xn = (x - run_mean[None, :, None]) * (gamma / jnp.sqrt(run_var + eps))[None, :, None] \
        + beta[None, :, None]
    act = _gelu_exact(xn)
    out = lax.conv_general_dilated(
        act, conv_w, window_strides=(stride,), padding=[(pad, pad)],
        dimension_numbers=("NCH", "OIH", "NCH"))
    return out + conv_b[None, :, None]


if __name__ == "__main__":
    def run_case(N, C_IN, C_OUT, L, K, STRIDE, tl):
        key = jax.random.PRNGKey(0)
        kx, kw, kb, kg, kbe, km, kv = jax.random.split(key, 7)
        x = jax.random.normal(kx, (N, C_IN, L), dtype=jnp.float32)
        conv_w = jax.random.normal(kw, (C_OUT, C_IN, K), dtype=jnp.float32) * 0.2
        conv_b = jax.random.normal(kb, (C_OUT,), dtype=jnp.float32) * 0.1
        gamma = 1.0 + 0.1 * jax.random.normal(kg, (C_IN,), dtype=jnp.float32)
        beta = 0.1 * jax.random.normal(kbe, (C_IN,), dtype=jnp.float32)
        run_mean = 0.1 * jax.random.normal(km, (C_IN,), dtype=jnp.float32)
        run_var = jax.random.uniform(kv, (C_IN,), dtype=jnp.float32, minval=0.5, maxval=1.5)

        fwd = jax.jit(functools.partial(res_cnn_forward, stride=STRIDE, tl=tl))
        out = jax.block_until_ready(fwd(x, gamma, beta, run_mean, run_var, conv_w, conv_b))
        ref = jax.block_until_ready(
            res_cnn_reference(x, gamma, beta, run_mean, run_var, conv_w, conv_b, stride=STRIDE))
        assert out.shape == ref.shape, (out.shape, ref.shape)
        np.testing.assert_allclose(np.asarray(out), np.asarray(ref), rtol=1e-4, atol=1e-4)

    # stride=1, whole output row in one tile (default TL picker -> single big tile).
    run_case(N=2, C_IN=4, C_OUT=8, L=512, K=3, STRIDE=1, tl=None)
    # stride=1, forced small tiles -> exercises the multi-tile / dynamic-window path.
    run_case(N=2, C_IN=4, C_OUT=8, L=512, K=3, STRIDE=1, tl=128)
    # stride=2, K=5 -> length-major strided-slice path, single tile.
    run_case(N=2, C_IN=4, C_OUT=8, L=512, K=5, STRIDE=2, tl=None)
    # stride=2, multi-tile.
    run_case(N=2, C_IN=4, C_OUT=8, L=512, K=5, STRIDE=2, tl=128)
    # tiny sequence -> block == full dims everywhere.
    run_case(N=2, C_IN=4, C_OUT=8, L=16, K=3, STRIDE=1, tl=None)

    print("KERNEL_OK")
</pallas_src>

<mosaic_0001>
module attributes {stable_mosaic.version = 11 : i64} {
  func.func @kernel(%arg0: i32, %arg1: i32, %arg2: memref<1x4x512xf32, #tpu.memory_space<vmem>>, %arg3: memref<4x1xf32, #tpu.memory_space<vmem>>, %arg4: memref<4x1xf32, #tpu.memory_space<vmem>>, %arg5: memref<8x12xf32, #tpu.memory_space<vmem>>, %arg6: memref<8x1xf32, #tpu.memory_space<vmem>>, %arg7: memref<1x8x512xf32, #tpu.memory_space<vmem>>, %arg8: memref<4x640xf32, #tpu.memory_space<vmem>>) attributes {dimension_semantics = [#tpu.dimension_semantics<parallel>, #tpu.dimension_semantics<arbitrary>], iteration_bounds = array<i64: 2, 1>, scalar_prefetch = 0 : i64, scratch_operands = 1 : i64, tpu.core_type = #tpu.core_type<tc>, window_params = [{transform_indices = @transform_0, window_bounds = array<i64: 1, 4, 512>}, {pipeline_mode = #tpu.pipeline_mode<synchronous>, transform_indices = @transform_1, window_bounds = array<i64: 4, 1>}, {pipeline_mode = #tpu.pipeline_mode<synchronous>, transform_indices = @transform_2, window_bounds = array<i64: 4, 1>}, {pipeline_mode = #tpu.pipeline_mode<synchronous>, transform_indices = @transform_3, window_bounds = array<i64: 8, 12>}, {pipeline_mode = #tpu.pipeline_mode<synchronous>, transform_indices = @transform_4, window_bounds = array<i64: 8, 1>}, {transform_indices = @transform_5, window_bounds = array<i64: 1, 8, 512>}]} {
    %c0_i32 = arith.constant 0 : i32
    %0 = arith.cmpi eq, %arg1, %c0_i32 : i32
    %1 = arith.extui %0 : i1 to i32
    %c0_i32_0 = arith.constant 0 : i32
    %2 = arith.cmpi ne, %1, %c0_i32_0 : i32
    scf.if %2 {
      %cst_9 = arith.constant 0.000000e+00 : f32
      %16 = vector.broadcast %cst_9 : f32 to vector<4x640xf32>
      %c0_10 = arith.constant 0 : index
      %c0_11 = arith.constant 0 : index
      %17 = vector.load %arg8[%c0_10, %c0_11] : memref<4x640xf32, #tpu.memory_space<vmem>>, vector<4x640xf32>
      tpu.vector_store %arg8[%c0_10, %c0_11], %16 {strides = array<i32>} : memref<4x640xf32, #tpu.memory_space<vmem>>, vector<4x640xf32>,
      %c0_12 = arith.constant 0 : index
      %c0_13 = arith.constant 0 : index
      %c0_14 = arith.constant 0 : index
      %18 = vector.load %arg2[%c0_12, %c0_13, %c0_14] : memref<1x4x512xf32, #tpu.memory_space<vmem>>, vector<1x4x512xf32>
      %19 = vector.shape_cast %18 : vector<1x4x512xf32> to vector<4x512xf32>
      %c0_15 = arith.constant 0 : index
      %c0_16 = arith.constant 0 : index
      %20 = vector.load %arg3[%c0_15, %c0_16] : memref<4x1xf32, #tpu.memory_space<vmem>>, vector<4x1xf32>
      %21 = vector.broadcast %20 : vector<4x1xf32> to vector<4x512xf32>
      %22 = arith.mulf %19, %21 : vector<4x512xf32>
      %c0_17 = arith.constant 0 : index
      %c0_18 = arith.constant 0 : index
      %23 = vector.load %arg4[%c0_17, %c0_18] : memref<4x1xf32, #tpu.memory_space<vmem>>, vector<4x1xf32>
      %24 = vector.broadcast %23 : vector<4x1xf32> to vector<4x512xf32>
      %25 = arith.addf %22, %24 : vector<4x512xf32>
      %cst_19 = arith.constant 5.000000e-01 : f32
      %26 = vector.broadcast %cst_19 : f32 to vector<4x512xf32>
      %27 = arith.mulf %26, %25 : vector<4x512xf32>
      %cst_20 = arith.constant 0.707106769 : f32
      %28 = vector.broadcast %cst_20 : f32 to vector<4x512xf32>
      %29 = arith.mulf %25, %28 : vector<4x512xf32>
      %30 = math.erf %29 : vector<4x512xf32>
      %cst_21 = arith.constant 1.000000e+00 : f32
      %31 = vector.broadcast %cst_21 : f32 to vector<4x512xf32>
      %32 = arith.addf %31, %30 : vector<4x512xf32>
      %33 = arith.mulf %27, %32 : vector<4x512xf32>
      %c0_22 = arith.constant 0 : index
      %c1 = arith.constant 1 : index
      %34 = vector.load %arg8[%c0_22, %c1] : memref<4x640xf32, #tpu.memory_space<vmem>>, vector<4x512xf32>
      tpu.vector_store %arg8[%c0_22, %c1], %33 {strides = array<i32>} : memref<4x640xf32, #tpu.memory_space<vmem>>, vector<4x512xf32>,
    } else {
    }
    %c0 = arith.constant 0 : index
    %c0_1 = arith.constant 0 : index
    %3 = vector.load %arg8[%c0, %c0_1] : memref<4x640xf32, #tpu.memory_space<vmem>>, vector<4x514xf32>
    %4 = vector.extract_strided_slice %3 {offsets = [0, 0], sizes = [4, 512], strides = [1, 1]} : vector<4x514xf32> to vector<4x512xf32>
    %5 = vector.extract_strided_slice %3 {offsets = [0, 1], sizes = [4, 512], strides = [1, 1]} : vector<4x514xf32> to vector<4x512xf32>
    %6 = vector.extract_strided_slice %3 {offsets = [0, 2], sizes = [4, 512], strides = [1, 1]} : vector<4x514xf32> to vector<4x512xf32>
    %7 = tpu.concatenate %4, %5, %6 in 0 : vector<4x512xf32>, vector<4x512xf32>, vector<4x512xf32> -> vector<12x512xf32>
    %c0_2 = arith.constant 0 : index
    %c0_3 = arith.constant 0 : index
    %8 = vector.load %arg5[%c0_2, %c0_3] : memref<8x12xf32, #tpu.memory_space<vmem>>, vector<8x12xf32>
    %cst = arith.constant dense<0.000000e+00> : vector<8x512xf32>
    %9 = tpu.matmul %8, %7, %cst {dimension_numbers = #tpu.dot_dimension_numbers<[1], [0], [0], [1], [0, 0, 1, 1], [], []>} : vector<8x12xf32>, vector<12x512xf32>, vector<8x512xf32> -> vector<8x512xf32>
    %c0_4 = arith.constant 0 : index
    %c0_5 = arith.constant 0 : index
    %10 = vector.load %arg6[%c0_4, %c0_5] : memref<8x1xf32, #tpu.memory_space<vmem>>, vector<8x1xf32>
    %11 = vector.broadcast %10 : vector<8x1xf32> to vector<8x512xf32>
    %12 = arith.addf %9, %11 : vector<8x512xf32>
    %c0_6 = arith.constant 0 : index
    %c0_7 = arith.constant 0 : index
    %c0_8 = arith.constant 0 : index
    %13 = vector.load %arg7[%c0_6, %c0_7, %c0_8] : memref<1x8x512xf32, #tpu.memory_space<vmem>>, vector<1x8x512xf32>
    %14 = vector.shape_cast %13 : vector<1x8x512xf32> to vector<8x512xf32>
    %15 = vector.shape_cast %12 : vector<8x512xf32> to vector<1x8x512xf32>
    tpu.vector_store %arg7[%c0_6, %c0_7, %c0_8], %15 {strides = array<i32>} : memref<1x8x512xf32, #tpu.memory_space<vmem>>, vector<1x8x512xf32>,
    return
  }
  func.func @transform_0(%arg0: i32, %arg1: i32) -> (i32, i32, i32) {
    %c0_i32 = arith.constant 0 : i32
    %c0_i32_0 = arith.constant 0 : i32
    %c0_i32_1 = arith.constant 0 : i32
    return %arg0, %c0_i32, %c0_i32_0 : i32, i32, i32
  }
  func.func @transform_1(%arg0: i32, %arg1: i32) -> (i32, i32) {
    %c0_i32 = arith.constant 0 : i32
    %c0_i32_0 = arith.constant 0 : i32
    %c0_i32_1 = arith.constant 0 : i32
    return %c0_i32, %c0_i32_0 : i32, i32
  }
  func.func @transform_2(%arg0: i32, %arg1: i32) -> (i32, i32) {
    %c0_i32 = arith.constant 0 : i32
    %c0_i32_0 = arith.constant 0 : i32
    %c0_i32_1 = arith.constant 0 : i32
    return %c0_i32, %c0_i32_0 : i32, i32
  }
  func.func @transform_3(%arg0: i32, %arg1: i32) -> (i32, i32) {
    %c0_i32 = arith.constant 0 : i32
    %c0_i32_0 = arith.constant 0 : i32
    %c0_i32_1 = arith.constant 0 : i32
    return %c0_i32, %c0_i32_0 : i32, i32
  }
  func.func @transform_4(%arg0: i32, %arg1: i32) -> (i32, i32) {
    %c0_i32 = arith.constant 0 : i32
    %c0_i32_0 = arith.constant 0 : i32
    %c0_i32_1 = arith.constant 0 : i32
    return %c0_i32, %c0_i32_0 : i32, i32
  }
  func.func @transform_5(%arg0: i32, %arg1: i32) -> (i32, i32, i32) {
    %c0_i32 = arith.constant 0 : i32
    %c0_i32_0 = arith.constant 0 : i32
    return %arg0, %c0_i32, %arg1 : i32, i32, i32
  }
}

</mosaic_0001>

<llo_original>
// kernel: res_cnn_forward.1
$region0: #{res_cnn_forward.1}
  #allocation0 [shape = 'u32[]', space=smem, size = 0x4, offset = 0x4, fixed_abs, tag = 'smem constant byte address 0x4 - core index']
  #allocation1 [shape = 'u32[144,128]{1,0:T(1,128)}', space=vmem, size = 0x12000, scoped, tag = 'internal scratch']
  #allocation2 [shape = 'f32[4,640]{1,0:T(4,128)}', space=vmem, size = 0x2800, scoped, tag = 'scratch operand']
  %s0 = inlined_call_operand.vmem [shape: f32[2,4,512], index: 0, kind: input, shape index: {}]
  %s1 = inlined_call_operand.vmem [shape: f32[4,1], index: 1, kind: input, shape index: {}]
  %s2 = inlined_call_operand.vmem [shape: f32[4,1], index: 2, kind: input, shape index: {}]
  %s3 = inlined_call_operand.vmem [shape: f32[8,12], index: 3, kind: input, shape index: {}]
  %s4 = inlined_call_operand.vmem [shape: f32[8,1], index: 4, kind: input, shape index: {}]
  %s5 = inlined_call_operand.hbm [shape: f32[2,8,512], index: 5, kind: output, shape index: {}]
  %s6 = sld [smem:[#allocation0]]
  $region57: #{res_cnn_forward.1} parent=0
    _
  %s8 = ssub.s32 1, %s6
  %s9 = scalar_select 0, %s8, %s6
  $region1: #{res_cnn_forward.1} parent=0
    #allocation3 [shape = 'u8[32768]{0}', space=vmem, size = 0x8000, scoped, tag = 'output window, operand 0']
    #allocation4 [shape = 's32[2]{0}', space=sflag, size = 0x8, scoped, tag = 'scoped memory for res_cnn_forward.1']
    %10 = vsyncpa [#allocation4], 0
    %s11 = scalar_lea.sflag [#allocation4], 1
    %12 = vsyncpa %s11, 0
    loop: start=0, step=1, limit=4
    $region2: #{res_cnn_forward.1} parent=1 // loop_pre_header
      _
    $region3: #{res_cnn_forward.1} parent=1 // loop_header
      %s14 = sphi 0, %s18
      %p15 = scmp.ge.s32.totalorder %s14, 4
      %s21 = sphi 0, %s33
      %s22 = sphi 0, %s29
      %s23 = sphi 0, %s21
      %s24 = sphi 0, %s22
      %s25 = sphi 0, %s23
      %s26 = sphi 0, %s24
      %s36 = sphi 0, %s38
      %s39 = sphi 0, %s36
      %s40 = sphi 0, %s39
      %s56 = sphi 0, %s40
      %s60 = sphi 0, %s60
      %s62 = sphi 0, %s60
      %s63 = sphi 0, %s62
      %s77 = sphi 0, %s63
      %s81 = sphi 0, %s81
      %s83 = sphi 0, %s81
      %s84 = sphi 0, %s83
      %s98 = sphi 0, %s84
      %s102 = sphi 0, %s102
      %s104 = sphi 0, %s102
      %s105 = sphi 0, %s104
      %s119 = sphi 0, %s105
      %s123 = sphi 0, %s123
      %s125 = sphi 0, %s123
      %s126 = sphi 0, %s125
      %s140 = sphi 0, %s126
      %s148 = sphi 0, %s150
      %s151 = sphi 0, %s148
      %s152 = sphi 0, %s151
      %s168 = sphi 0, %s152
    $region4: #{res_cnn_forward.1} parent=1 // loop_header_branch
      %17 = sbr.rel (%p15) target = $region8
    $region5: #{res_cnn_forward.1} parent=1 // loop_body
      %s19 = ssub.s32 %s14, 1
      %s20 = ssub.s32 %s14, 2
      %s27 = sadd.s32 1, %s22
      %p28 = scmp.ge.s32.totalorder %s27, 1
      %s29 = scalar_select %p28, 0, %s27
      %s30 = sadd.s32 1, %s21
      %s31 = scalar_select %p28, %s30, %s21
      %p32 = scmp.ge.s32.totalorder %s31, 2
      %s33 = scalar_select %p32, 0, %s31
      %s34 = ssub.s32 %s21, %s33
      %p35 = scmp.eq.s32.totalorder %s34, 0
      %s37 = sadd.s32 %s36, 1
      %s38 = scalar_select %p35, %s36, %s37
      %p41 = pneg %p35
      %p42 = scmp.eq.s32.totalorder %s14, 1
      %p43 = por %p41, %p42
      %p44 = scmp.ne.s32.totalorder %s36, %s39
      %p45 = scmp.eq.s32.totalorder %s14, 0
      %p46 = por %p44, %p45
      %p47 = scmp.ne.s32.totalorder %s36, %s39
      %p48 = scmp.eq.s32.totalorder %s19, 1
      %p49 = por %p47, %p48
      %p50 = scmp.ne.s32.totalorder %s39, %s40
      %p51 = scmp.eq.s32.totalorder %s19, 0
      %p52 = por %p50, %p51
      %p53 = scmp.ne.s32.totalorder %s39, %s40
      %p54 = scmp.eq.s32.totalorder %s20, 1
      %p55 = por %p53, %p54
      %p57 = scmp.ne.s32.totalorder %s40, %s56
      %p58 = scmp.eq.s32.totalorder %s20, 0
      %p59 = por %p57, %p58
      %s61 = sadd.s32 %s60, 1
      %p64 = scmp.eq.s32.totalorder %s14, 1
      %p65 = scmp.ne.s32.totalorder %s60, %s62
      %p66 = scmp.eq.s32.totalorder %s14, 0
      %p67 = por %p65, %p66
      %p68 = scmp.ne.s32.totalorder %s60, %s62
      %p69 = scmp.eq.s32.totalorder %s19, 1
      %p70 = por %p68, %p69
      %p71 = scmp.ne.s32.totalorder %s62, %s63
      %p72 = scmp.eq.s32.totalorder %s19, 0
      %p73 = por %p71, %p72
      %p74 = scmp.ne.s32.totalorder %s62, %s63
      %p75 = scmp.eq.s32.totalorder %s20, 1
      %p76 = por %p74, %p75
      %p78 = scmp.ne.s32.totalorder %s63, %s77
      %p79 = scmp.eq.s32.totalorder %s20, 0
      %p80 = por %p78, %p79
      %s82 = sadd.s32 %s81, 1
      %p85 = scmp.eq.s32.totalorder %s14, 1
      %p86 = scmp.ne.s32.totalorder %s81, %s83
      %p87 = scmp.eq.s32.totalorder %s14, 0
      %p88 = por %p86, %p87
      %p89 = scmp.ne.s32.totalorder %s81, %s83
      %p90 = scmp.eq.s32.totalorder %s19, 1
      %p91 = por %p89, %p90
      %p92 = scmp.ne.s32.totalorder %s83, %s84
      %p93 = scmp.eq.s32.totalorder %s19, 0
      %p94 = por %p92, %p93
      %p95 = scmp.ne.s32.totalorder %s83, %s84
      %p96 = scmp.eq.s32.totalorder %s20, 1
      %p97 = por %p95, %p96
      %p99 = scmp.ne.s32.totalorder %s84, %s98
      %p100 = scmp.eq.s32.totalorder %s20, 0
      %p101 = por %p99, %p100
      %s103 = sadd.s32 %s102, 1
      %p106 = scmp.eq.s32.totalorder %s14, 1
      %p107 = scmp.ne.s32.totalorder %s102, %s104
      %p108 = scmp.eq.s32.totalorder %s14, 0
      %p109 = por %p107, %p108
      %p110 = scmp.ne.s32.totalorder %s102, %s104
      %p111 = scmp.eq.s32.totalorder %s19, 1
      %p112 = por %p110, %p111
      %p113 = scmp.ne.s32.totalorder %s104, %s105
      %p114 = scmp.eq.s32.totalorder %s19, 0
      %p115 = por %p113, %p114
      %p116 = scmp.ne.s32.totalorder %s104, %s105
      %p117 = scmp.eq.s32.totalorder %s20, 1
      %p118 = por %p116, %p117
      %p120 = scmp.ne.s32.totalorder %s105, %s119
      %p121 = scmp.eq.s32.totalorder %s20, 0
      %p122 = por %p120, %p121
      %s124 = sadd.s32 %s123, 1
      %p127 = scmp.eq.s32.totalorder %s14, 1
      %p128 = scmp.ne.s32.totalorder %s123, %s125
      %p129 = scmp.eq.s32.totalorder %s14, 0
      %p130 = por %p128, %p129
      %p131 = scmp.ne.s32.totalorder %s123, %s125
      %p132 = scmp.eq.s32.totalorder %s19, 1
      %p133 = por %p131, %p132
      %p134 = scmp.ne.s32.totalorder %s125, %s126
      %p135 = scmp.eq.s32.totalorder %s19, 0
      %p136 = por %p134, %p135
      %p137 = scmp.ne.s32.totalorder %s125, %s126
      %p138 = scmp.eq.s32.totalorder %s20, 1
      %p139 = por %p137, %p138
      %p141 = scmp.ne.s32.totalorder %s126, %s140
      %p142 = scmp.eq.s32.totalorder %s20, 0
      %p143 = por %p141, %p142
      %s144 = ssub.s32 %s21, %s33
      %s145 = ssub.s32 %s22, %s29
      %s146 = sor.u32 %s144, %s145
      %p147 = scmp.eq.s32.totalorder %s146, 0
      %s149 = sadd.s32 %s148, 1
      %s150 = scalar_select %p147, %s148, %s149
      %p153 = pneg %p147
      %p154 = scmp.eq.s32.totalorder %s14, 1
      %p155 = por %p153, %p154
      %p156 = scmp.ne.s32.totalorder %s148, %s151
      %p157 = scmp.eq.s32.totalorder %s14, 0
      %p158 = por %p156, %p157
      %p159 = scmp.ne.s32.totalorder %s148, %s151
      %p160 = scmp.eq.s32.totalorder %s19, 1
      %p161 = por %p159, %p160
      %p162 = scmp.ne.s32.totalorder %s151, %s152
      %p163 = scmp.eq.s32.totalorder %s19, 0
      %p164 = por %p162, %p163
      %p165 = scmp.ne.s32.totalorder %s151, %s152
      %p166 = scmp.eq.s32.totalorder %s20, 1
      %p167 = por %p165, %p166
      %p169 = scmp.ne.s32.totalorder %s152, %s168
      %p170 = scmp.eq.s32.totalorder %s20, 0
      %p171 = por %p169, %p170
      %p172 = scmp.le.s32.totalorder 1, %s14
      %p173 = scmp.lt.s32.totalorder %s14, 3
      %p174 = pnand %p172, %p173
      %p175 = pneg %p174
      // Predicated region
      $region9: #{res_cnn_forward.1} parent=5 // pred_check
        _
      $region10: #{res_cnn_forward.1} parent=5 // pred_check_branch
        %177 = sbr.rel (%p174) target = $region12
      $region11: #{res_cnn_forward.1} parent=5 // pred_region
        %s178 = ssub.s32 %s14, 1
        // Predicated region
        $region13: #{res_cnn_forward.1} parent=11 // pred_check
          %p179 = pneg %p73
        $region14: #{res_cnn_forward.1} parent=11 // pred_check_branch
          %181 = sbr.rel (%p179) target = $region16
        $region15: #{res_cnn_forward.1} parent=11 // pred_region
          _
        $region16: #{res_cnn_forward.1} parent=11 // pred_fallthru
          _
        // Predicated region
        $region17: #{res_cnn_forward.1} parent=11 // pred_check
          %p182 = pneg %p94
        $region18: #{res_cnn_forward.1} parent=11 // pred_check_branch
          %184 = sbr.rel (%p182) target = $region20
        $region19: #{res_cnn_forward.1} parent=11 // pred_region
          _
        $region20: #{res_cnn_forward.1} parent=11 // pred_fallthru
          _
        // Predicated region
        $region21: #{res_cnn_forward.1} parent=11 // pred_check
          %p185 = pneg %p115
        $region22: #{res_cnn_forward.1} parent=11 // pred_check_branch
          %187 = sbr.rel (%p185) target = $region24
        $region23: #{res_cnn_forward.1} parent=11 // pred_region
          _
        $region24: #{res_cnn_forward.1} parent=11 // pred_fallthru
          _
        // Predicated region
        $region25: #{res_cnn_forward.1} parent=11 // pred_check
          %p188 = pneg %p136
        $region26: #{res_cnn_forward.1} parent=11 // pred_check_branch
          %190 = sbr.rel (%p188) target = $region28
        $region27: #{res_cnn_forward.1} parent=11 // pred_region
          _
        $region28: #{res_cnn_forward.1} parent=11 // pred_fallthru
          _
      $region12: #{res_cnn_forward.1} parent=5 // pred_fallthru
        _
      %p191 = scmp.lt.s32.totalorder %s14, 2
      // Predicated region
      $region29: #{res_cnn_forward.1} parent=5 // pred_check
        %p192 = pneg %p191
      $region30: #{res_cnn_forward.1} parent=5 // pred_check_branch
        %194 = sbr.rel (%p192) target = $region32
      $region31: #{res_cnn_forward.1} parent=5 // pred_region
        // Predicated region
        $region33: #{res_cnn_forward.1} parent=31 // pred_check
          %p195 = pneg %p46
        $region34: #{res_cnn_forward.1} parent=31 // pred_check_branch
          %197 = sbr.rel (%p195) target = $region36
        $region35: #{res_cnn_forward.1} parent=31 // pred_region
          %p198 = scmp.lt.s32.totalorder %s21, 1
          %s199 = scalar_select %p198, %s21, 1
          %s200 = smul.addr %s199, 4
          %s201 = smul.addr %s200, 4
          %s202 = scalar_lea.vmem %s0, %s201
        $region36: #{res_cnn_forward.1} parent=31 // pred_fallthru
          _
      $region32: #{res_cnn_forward.1} parent=5 // pred_fallthru
        _
      %p203 = scmp.le.s32.totalorder 1, %s14
      %p204 = scmp.lt.s32.totalorder %s14, 3
      %p205 = pnand %p203, %p204
      %p206 = pneg %p205
      // Predicated region
      $region37: #{res_cnn_forward.1} parent=5 // pred_check
        _
      $region38: #{res_cnn_forward.1} parent=5 // pred_check_branch
        %208 = sbr.rel (%p205) target = $region40
      $region39: #{res_cnn_forward.1} parent=5 // pred_region
        %s209 = ssub.s32 %s14, 1
        %p210 = scmp.lt.s32.totalorder %s23, 1
        %s211 = scalar_select %p210, %s23, 1
        %s212 = smul.addr %s211, 4
        %s213 = smul.addr %s212, 4
        %s214 = scalar_lea.vmem %s0, %s213
        %p215 = pneg %p52
        %p216 = pneg %p49
        %p217 = pneg %p73
        %p218 = pneg %p70
        %p219 = pneg %p94
        %p220 = pneg %p91
        %p221 = pneg %p115
        %p222 = pneg %p112
        %p223 = pneg %p136
        %p224 = pneg %p133
        %p225 = pneg %p164
        %p226 = pneg %p161
        %s227 = sand.u32 %s151, 1
        %s228 = scalar_lea.sflag [#allocation4], %s227
        %s229 = sand.u32 %s151, 1
        %s230 = smul.addr %s229, 32
        %s231 = scalar_lea.vmem [#allocation3], %s230
        %p232 = scmp.lt.s32.totalorder %s23, 1
        %s233 = scalar_select %p232, %s23, 1
        %s234 = smul.addr %s233, 4
        %s235 = smul.addr %s234, 4
        %s236 = scalar_lea.vmem %s0, %s235
        %s237 = smul.u32 4, %s24
        %p238 = scmp.eq.s32.totalorder %s24, 0
        // Predicated region
        $region41: #{res_cnn_forward.1} parent=39 // pred_check
          %p239 = pneg %p238
        $region42: #{res_cnn_forward.1} parent=39 // pred_check_branch
          %241 = sbr.rel (%p239) target = $region44
        $region43: #{res_cnn_forward.1} parent=39 // pred_region
          %242 = vst [vmem:[#allocation2] sm:$0xff] 0.0
          %243 = vst [vmem:[#allocation2 + $0x8] sm:$0xff] 0.0
          %244 = vst [vmem:[#allocation2 + $0x10] sm:$0xf] 0.0
          %v245 = vld [vmem:[%s236] sm:$0xff]
          %v246 = vld [vmem:[%s236 + $0x8] sm:$0xff]
          %v247 = vld [vmem:[%s1] sm:$0xf]
          %249 = vset.pattern.permute.xlu0 0
          %250 = vperm.xlu0 %249, %v247
          %v251 = vpop.permute.xlu0 %250
          %v253 = vunpack.c.l.s4 839922192
          %v254 = vunpack.c.0.s8 %v253
          %v255 = vlaneseq
          %v256 = vshrl.u32 %v255, 7
          %v257 = vsub.s32 %v254, %v256
          %v258 = vrot.slane %v251, %v257
          %v260 = vmul.f32 %v245, %v258
          %v261 = vmul.f32 %v246, %v258
          %v262 = vld [vmem:[%s2] sm:$0xf]
          %264 = vset.pattern.permute.xlu0 0
          %265 = vperm.xlu0 %264, %v262
          %v266 = vpop.permute.xlu0 %265
          %v268 = vunpack.c.l.s4 839922192
          %v269 = vunpack.c.0.s8 %v268
          %v270 = vlaneseq
          %v271 = vshrl.u32 %v270, 7
          %v272 = vsub.s32 %v269, %v271
          %v273 = vrot.slane %v266, %v272
          %v275 = vadd.f32 %v260, %v273
          %v276 = vadd.f32 %v261, %v273
          %v277 = vmul.f32 %v275, 0.5
          %v278 = vmul.f32 %v276, 0.5
          %v279 = vmul.f32 %v275, 0.70710677
          %v280 = vmul.f32 %v276, 0.70710677
          %v281 = verf.f32.pop %v279
          %v282 = verf.f32.pop %v280
          %v283 = vadd.f32 %v281, 1.0
          %v284 = vadd.f32 %v282, 1.0
          %v285 = vmul.f32 %v277, %v283
          %v286 = vmul.f32 %v278, %v284
          %289 = vrot.lane.b32.xlu0 %v285, 1
          %v290 = vpop.permute.xlu0 %289
          %291 = vrot.lane.b32.xlu0 %v286, 1
          %v292 = vpop.permute.xlu0 %291
          %v293 = vrot.slane %v290, 4
          %v294 = vrot.slane %v292, 4
          %vm295 = vcmask 7168
          %v296 = vsel %vm295, %v293, %v290
          %vm297 = vcmask 1043456
          %v298 = vsel %vm297, %v293, %v294
          %v299 = vsel %vm295, %v298, %v292
          %vm303 = vcmask 1043464
          %vm304 = vcmask 1047556
          %vm305 = vmor %vm304, %vm303
          %306 = vst.msk [vmem:[#allocation2] sm:$0xff] %vm305, %v296
          %307 = vst [vmem:[#allocation2 + $0x8] sm:$0xff] %v299
          %vm308 = vcmask 3072
          %309 = vst.msk [vmem:[#allocation2 + $0x10] sm:$0xf] %vm308, %v294
        $region44: #{res_cnn_forward.1} parent=39 // pred_fallthru
          _
        %v310 = vld [vmem:[#allocation2] sm:$0xff]
        %v311 = vld [vmem:[#allocation2 + $0x8] sm:$0xff]
        %v312 = vld [vmem:[#allocation2 + $0x10] sm:$0xf]
        %v315 = vcombine.high %v310, %v310
        %v316 = vcombine.high %v311, %v311
        %v320 = vcombine.low %v310, %v310
        %v321 = vcombine.low %v311, %v311
        %v322 = vcombine.low %v312, %v312
        %323 = vrot.lane.b32.xlu0 %v320, 127
        %v324 = vpop.permute.xlu0 %323
        %325 = vrot.lane.b32.xlu0 %v310, 127
        %v326 = vpop.permute.xlu0 %325
        %327 = vrot.lane.b32.xlu0 %v321, 127
        %v328 = vpop.permute.xlu0 %327
        %329 = vrot.lane.b32.xlu0 %v311, 127
        %v330 = vpop.permute.xlu0 %329
        %331 = vrot.lane.b32.xlu0 %v322, 127
        %v332 = vpop.permute.xlu0 %331
        %vm333 = vcmask 1039360
        %v334 = vsel %vm333, %v324, %v326
        %v335 = vsel %vm333, %v326, %v328
        %v336 = vsel %vm333, %v328, %v330
        %v337 = vsel %vm333, %v330, %v332
        %342 = vrot.lane.b32.xlu0 %v310, 126
        %v343 = vpop.permute.xlu0 %342
        %344 = vrot.lane.b32.xlu0 %v315, 126
        %v345 = vpop.permute.xlu0 %344
        %346 = vrot.lane.b32.xlu0 %v311, 126
        %v347 = vpop.permute.xlu0 %346
        %348 = vrot.lane.b32.xlu0 %v316, 126
        %v349 = vpop.permute.xlu0 %348
        %350 = vrot.lane.b32.xlu0 %v312, 126
        %v351 = vpop.permute.xlu0 %350
        %vm352 = vcmask 1031168
        %v353 = vsel %vm352, %v343, %v345
        %v354 = vsel %vm352, %v345, %v347
        %v355 = vsel %vm352, %v347, %v349
        %v356 = vsel %vm352, %v349, %v351
        %vm357 = vcmask 1043456
        %v358 = vsel %vm357, %v310, %v334
        %v359 = vsel %vm357, %v315, %v335
        %v360 = vsel %vm357, %v311, %v336
        %v361 = vsel %vm357, %v316, %v337
        %v362 = vld [vmem:[%s3] sm:$0xff]
        %v363 = vld [vmem:[%s4] sm:$0xff]
        %365 = vset.pattern.permute.xlu0 0
        %366 = vperm.xlu0 %365, %v363
        %v367 = vpop.permute.xlu0 %366
        %vm369 = vcmask 97280
        %v371 = vsel %vm369, %v362, 0
        %v373 = vsel %vm357, %v353, 0
        %v375 = vsel %vm357, %v354, 0
        %v377 = vsel %vm357, %v355, 0
        %v379 = vsel %vm357, %v356, 0
        %381 = vmatprep.subr.mxu0 %v359
        %382 = vmatpush1.msra.mxu0 %v358
        %383 = vmatprep.subr.mxu0 %v375
        %384 = vmatpush1.msra.mxu0 %v373
        %385 = vmatprep.subr.mxu0 0.0
        %386 = vmatpush1.msra.mxu0 0.0
        %387 = vmatprep.subr.mxu0 0.0
        %388 = vmatpush1.msra.mxu0 0.0
        %389 = vmatprep.subr.mxu0 0.0
        %390 = vmatpush1.msra.mxu0 0.0
        %391 = vmatprep.subr.mxu0 0.0
        %392 = vmatpush1.msra.mxu0 0.0
        %393 = vmatprep.subr.mxu0 0.0
        %394 = vmatpush1.msra.mxu0 0.0
        %395 = vmatprep.subr.mxu0 0.0
        %396 = vmatpush1.msra.mxu0 0.0
        %397 = vmatprep.subr.mxu0 0.0
        %398 = vmatpush1.msra.mxu0 0.0
        %399 = vmatprep.subr.mxu0 0.0
        %400 = vmatpush1.msra.mxu0 0.0
        %401 = vmatprep.subr.mxu0 0.0
        %402 = vmatpush1.msra.mxu0 0.0
        %403 = vmatprep.subr.mxu0 0.0
        %404 = vmatpush1.msra.mxu0 0.0
        %405 = vmatprep.subr.mxu0 0.0
        %406 = vmatpush1.msra.mxu0 0.0
        %407 = vmatprep.subr.mxu0 0.0
        %408 = vmatpush1.msra.mxu0 0.0
        %409 = vmatprep.subr.mxu0 0.0
        %410 = vmatpush1.msra.mxu0 0.0
        %411 = vmatprep.subr.mxu0 0.0
        %412 = vmatpush1.msra.mxu0 0.0
        %413 = vmatprep.subr.mxu0 0.0
        %414 = vmatpush1.msra.mxu0 0.0
        %415 = vmatprep.subr.mxu0 0.0
        %416 = vmatpush1.msra.mxu0 0.0
        %417 = vmatprep.subr.mxu0 0.0
        %418 = vmatpush1.msra.mxu0 0.0
        %419 = vmatprep.subr.mxu0 0.0
        %420 = vmatpush1.msra.mxu0 0.0
        %421 = vmatprep.subr.mxu0 0.0
        %422 = vmatpush1.msra.mxu0 0.0
        %423 = vmatprep.subr.mxu0 0.0
        %424 = vmatpush1.msra.mxu0 0.0
        %425 = vmatprep.subr.mxu0 0.0
        %426 = vmatpush1.msra.mxu0 0.0
        %427 = vmatprep.subr.mxu0 0.0
        %428 = vmatpush1.msra.mxu0 0.0
        %429 = vmatprep.subr.mxu0 0.0
        %430 = vmatpush1.msra.mxu0 0.0
        %431 = vmatprep.subr.mxu0 0.0
        %432 = vmatpush1.msra.mxu0 0.0
        %433 = vmatprep.subr.mxu0 0.0
        %434 = vmatpush1.msra.mxu0 0.0
        %435 = vmatprep.subr.mxu0 0.0
        %436 = vmatpush1.msra.mxu0 0.0
        %437 = vmatprep.subr.mxu0 0.0
        %438 = vmatpush1.msra.mxu0 0.0
        %439 = vmatprep.subr.mxu0 0.0
        %440 = vmatpush1.msra.mxu0 0.0
        %441 = vmatprep.subr.mxu0 0.0
        %442 = vmatpush1.msra.mxu0 0.0
        %443 = vmatprep.subr.mxu0 0.0
        %444 = vmatpush1.msra.mxu0 0.0
        %445 = vmatprep.mubr.f32.mxu0 0.0
        %446 = vmatmul.mubr.f32.gmra.mrb[0].mxu0 %v371
        %v447 = vpop.f32.mrb[0].mxu0
        %v448 = vadd.f32 %v367, %v447
        %v449 = vpop.f32.mrb[0].mxu0
        %v450 = vadd.f32 %v367, %v449
        %451 = vdwg.mxu0
        %452 = vmatprep.subr.mxu0 %v361
        %453 = vmatpush1.msra.mxu0 %v360
        %454 = vmatprep.subr.mxu0 %v379
        %455 = vmatpush1.msra.mxu0 %v377
        %456 = vmatprep.subr.mxu0 0.0
        %457 = vmatpush1.msra.mxu0 0.0
        %458 = vmatprep.subr.mxu0 0.0
        %459 = vmatpush1.msra.mxu0 0.0
        %460 = vmatprep.subr.mxu0 0.0
        %461 = vmatpush1.msra.mxu0 0.0
        %462 = vmatprep.subr.mxu0 0.0
        %463 = vmatpush1.msra.mxu0 0.0
        %464 = vmatprep.subr.mxu0 0.0
        %465 = vmatpush1.msra.mxu0 0.0
        %466 = vmatprep.subr.mxu0 0.0
        %467 = vmatpush1.msra.mxu0 0.0
        %468 = vmatprep.subr.mxu0 0.0
        %469 = vmatpush1.msra.mxu0 0.0
        %470 = vmatprep.subr.mxu0 0.0
        %471 = vmatpush1.msra.mxu0 0.0
        %472 = vmatprep.subr.mxu0 0.0
        %473 = vmatpush1.msra.mxu0 0.0
        %474 = vmatprep.subr.mxu0 0.0
        %475 = vmatpush1.msra.mxu0 0.0
        %476 = vmatprep.subr.mxu0 0.0
        %477 = vmatpush1.msra.mxu0 0.0
        %478 = vmatprep.subr.mxu0 0.0
        %479 = vmatpush1.msra.mxu0 0.0
        %480 = vmatprep.subr.mxu0 0.0
        %481 = vmatpush1.msra.mxu0 0.0
        %482 = vmatprep.subr.mxu0 0.0
        %483 = vmatpush1.msra.mxu0 0.0
        %484 = vmatprep.subr.mxu0 0.0
        %485 = vmatpush1.msra.mxu0 0.0
        %486 = vmatprep.subr.mxu0 0.0
        %487 = vmatpush1.msra.mxu0 0.0
        %488 = vmatprep.subr.mxu0 0.0
        %489 = vmatpush1.msra.mxu0 0.0
        %490 = vmatprep.subr.mxu0 0.0
        %491 = vmatpush1.msra.mxu0 0.0
        %492 = vmatprep.subr.mxu0 0.0
        %493 = vmatpush1.msra.mxu0 0.0
        %494 = vmatprep.subr.mxu0 0.0
        %495 = vmatpush1.msra.mxu0 0.0
        %496 = vmatprep.subr.mxu0 0.0
        %497 = vmatpush1.msra.mxu0 0.0
        %498 = vmatprep.subr.mxu0 0.0
        %499 = vmatpush1.msra.mxu0 0.0
        %500 = vmatprep.subr.mxu0 0.0
        %501 = vmatpush1.msra.mxu0 0.0
        %502 = vmatprep.subr.mxu0 0.0
        %503 = vmatpush1.msra.mxu0 0.0
        %504 = vmatprep.subr.mxu0 0.0
        %505 = vmatpush1.msra.mxu0 0.0
        %506 = vmatprep.subr.mxu0 0.0
        %507 = vmatpush1.msra.mxu0 0.0
        %508 = vmatprep.subr.mxu0 0.0
        %509 = vmatpush1.msra.mxu0 0.0
        %510 = vmatprep.subr.mxu0 0.0
        %511 = vmatpush1.msra.mxu0 0.0
        %512 = vmatprep.subr.mxu0 0.0
        %513 = vmatpush1.msra.mxu0 0.0
        %514 = vmatprep.subr.mxu0 0.0
        %515 = vmatpush1.msra.mxu0 0.0
        %516 = vmatprep.mubr.f32.mxu0 0.0
        %517 = vmatmul.mubr.f32.gmra.mrb[0].mxu0 %v371
        %v518 = vpop.f32.mrb[0].mxu0
        %v519 = vadd.f32 %v367, %v518
        %v520 = vpop.f32.mrb[0].mxu0
        %v521 = vadd.f32 %v367, %v520
        %522 = vdwg.mxu0
        %523 = vst [vmem:[%s231] sm:$0xff] %v448
        %524 = vst [vmem:[%s231 + $0x8] sm:$0xff] %v450
        %525 = vst [vmem:[%s231 + $0x10] sm:$0xff] %v519
        %526 = vst [vmem:[%s231 + $0x18] sm:$0xff] %v521
        %s527 = sand.u32 %s151, 1
        %s528 = scalar_lea.sflag [#allocation4], %s527
        %s529 = sand.u32 %s151, 1
        %s530 = smul.addr %s529, 32
        %s531 = scalar_lea.vmem [#allocation3], %s530
        // Predicated region
        $region45: #{res_cnn_forward.1} parent=39 // pred_check
          %p532 = pneg %p161
        $region46: #{res_cnn_forward.1} parent=39 // pred_check_branch
          %534 = sbr.rel (%p532) target = $region48
        $region47: #{res_cnn_forward.1} parent=39 // pred_region
          %s535 = smul.u32 4, %s24
          %s537 = ssub.s32 512, 512
          %538 = vsyncadd %s528, %s537
          %s539 = smul.addr %s23, 4
          %s540 = sadd.s32 %s535, %s539
          %s541 = smul.addr %s540, 128
          %s542 = scalar_lea.hbm %s5, %s541
          %s544 = sshll.u32 %s531, 4
          %s545 = int_to_ptr.vmem [resolvable:$true] %s544
          %547 = dma.vmem_to_hbm [thread:$0]  %s545, 512, %s542, %s528
        $region48: #{res_cnn_forward.1} parent=39 // pred_fallthru
          _
      $region40: #{res_cnn_forward.1} parent=5 // pred_fallthru
        _
      %p548 = scmp.le.s32.totalorder 2, %s14
      // Predicated region
      $region49: #{res_cnn_forward.1} parent=5 // pred_check
        %p549 = pneg %p548
      $region50: #{res_cnn_forward.1} parent=5 // pred_check_branch
        %551 = sbr.rel (%p549) target = $region52
      $region51: #{res_cnn_forward.1} parent=5 // pred_region
        %s552 = ssub.s32 %s14, 2
        // Predicated region
        $region53: #{res_cnn_forward.1} parent=51 // pred_check
          %p553 = pneg %p167
        $region54: #{res_cnn_forward.1} parent=51 // pred_check_branch
          %555 = sbr.rel (%p553) target = $region56
        $region55: #{res_cnn_forward.1} parent=51 // pred_region
          %s556 = sand.u32 %s152, 1
          %s557 = scalar_lea.sflag [#allocation4], %s556
          %s558 = sand.u32 %s152, 1
          %s559 = smul.addr %s558, 32
          %s560 = scalar_lea.vmem [#allocation3], %s559
          %561 = dma.done %s557, 512
        $region56: #{res_cnn_forward.1} parent=51 // pred_fallthru
          _
      $region52: #{res_cnn_forward.1} parent=5 // pred_fallthru
        _
    $region6: #{res_cnn_forward.1} parent=1 // loop_footer
      %s18 = sadd.s32 1, %s14
    $region7: #{res_cnn_forward.1} parent=1 // loop_footer_branch
      %13 = sbr.rel target = $region3
    $region8: #{res_cnn_forward.1} parent=1 // loop_exit
      _
    %562 = vsyncpa [#allocation4], 1
    %s563 = scalar_lea.sflag [#allocation4], 1
    %564 = vsyncpa %s563, 1

</llo_original>
